<compile_context>
chip_gen: v7x
topology: tpu7x:2x2x1
jax: 0.10.0
libtpu: 0.0.40
codegen_flags: <defaults>
</compile_context>

<pallas_src>
import functools

import jax
import jax.numpy as jnp
from jax import lax
from jax.experimental import pallas as pl
from jax.experimental.pallas import tpu as pltpu


def _ce_label_smooth_kernel(
    x_ref, t_ref, out_ref, *, epsilon, num_classes, batch_total, tile_b
):
    # x_ref:   (TILE_B, K) logits (native dtype) in VMEM
    # t_ref:   (TILE_B, 1) int32 labels in VMEM
    # out_ref: (TILE_B, 1) f32 per-row (unnormalized) losses in VMEM
    i = pl.program_id(0)

    x = x_ref[...].astype(jnp.float32)                    # (TILE_B, K)
    labels = t_ref[...]                                   # (TILE_B, 1) int32
    tb, k = x.shape

    # Numerically stable logsumexp over classes.
    m = jnp.max(x, axis=1, keepdims=True)                 # (TILE_B, 1)
    shifted = x - m                                       # (TILE_B, K)
    lse = jnp.log(jnp.sum(jnp.exp(shifted), axis=1, keepdims=True))  # (TILE_B, 1)

    # shifted value at the target class via vectorized compare+select+reduce
    # (no one_hot materialization; 1-D iota unsupported on TPU -> 2-D iota).
    col = lax.broadcasted_iota(jnp.int32, (tb, k), 1)     # (TILE_B, K)
    shifted_t = jnp.sum(
        jnp.where(col == labels, shifted, 0.0), axis=1, keepdims=True
    )                                                     # (TILE_B, 1)
    shifted_sum = jnp.sum(shifted, axis=1, keepdims=True)  # (TILE_B, 1)

    # loss_row = sum_k (-smoothed_k * log_probs_k)
    #          = (1-eps)*(lse - shifted_t) + (eps/K)*(K*lse - sum_k shifted_k)
    row_loss = (1.0 - epsilon) * (lse - shifted_t) + (epsilon / num_classes) * (
        num_classes * lse - shifted_sum
    )

    # Zero-out padded batch rows (batch was padded up to a tile multiple).
    row_ids = i * tile_b + lax.broadcasted_iota(jnp.int32, (tb, 1), 0)
    row_loss = jnp.where(row_ids < batch_total, row_loss, 0.0)

    out_ref[...] = row_loss


def _round_up(x: int, m: int) -> int:
    return (x + m - 1) // m * m


def _pick_tile_b(batch: int, num_classes: int, itemsize: int) -> int:
    # Keep a single logits block <= ~2 MiB so the double-buffered pipeline
    # stays far below VMEM limits on every generation (v5e/v6e/v7x).
    budget_bytes = 2 * 1024 * 1024
    t = budget_bytes // max(1, num_classes * itemsize)
    t = max(8, (t // 8) * 8)
    t = min(t, _round_up(batch, 8))
    return t


def cross_entropy_label_smooth(inputs, targets, epsilon=0.1, tile_b=None):
    """inputs: (B, K) float logits (any float dtype); targets: (B,) int labels.

    Returns the scalar f32 label-smoothed cross-entropy loss
    (matches PyTorch CrossEntropyLabelSmooth.forward).
    """
    B, K = inputs.shape
    itemsize = jnp.dtype(inputs.dtype).itemsize
    if tile_b is None:
        tile_b = _pick_tile_b(B, K, itemsize)
    tile_b = int(tile_b)

    B_pad = _round_up(B, tile_b)
    num_tiles = B_pad // tile_b

    # Pad batch to a tile multiple (padded rows are masked inside the kernel).
    inputs_p = inputs
    targets_p = targets.astype(jnp.int32)
    if B_pad != B:
        inputs_p = jnp.pad(inputs, ((0, B_pad - B), (0, 0)))
        targets_p = jnp.pad(targets_p, (0, B_pad - B))
    targets_p = targets_p.reshape(B_pad, 1)

    kernel = functools.partial(
        _ce_label_smooth_kernel,
        epsilon=float(epsilon),
        num_classes=int(K),
        batch_total=int(B),
        tile_b=tile_b,
    )

    per_row = pl.pallas_call(
        kernel,
        out_shape=jax.ShapeDtypeStruct((B_pad, 1), jnp.float32),
        grid_spec=pltpu.PrefetchScalarGridSpec(
            num_scalar_prefetch=0,
            grid=(num_tiles,),
            in_specs=[
                pl.BlockSpec((tile_b, K), lambda i: (i, 0)),
                pl.BlockSpec((tile_b, 1), lambda i: (i, 0)),
            ],
            out_specs=pl.BlockSpec((tile_b, 1), lambda i: (i, 0)),
        ),
        compiler_params=pltpu.CompilerParams(
            dimension_semantics=("parallel",),
        ),
        cost_estimate=pl.CostEstimate(
            flops=int(5 * B_pad * K),
            transcendentals=int(B_pad * K),
            bytes_accessed=int(B_pad * K * itemsize + 2 * B_pad * 4),
        ),
    )(inputs_p, targets_p)

    # Final (tiny) reduction + global-B normalization in the wrapper.
    return jnp.sum(per_row) / B


def _reference(inputs, targets, epsilon=0.1):
    # Pure-JAX reference replicating the PyTorch forward exactly.
    K = inputs.shape[1]
    log_probs = jax.nn.log_softmax(inputs.astype(jnp.float32), axis=1)
    one_hot = jax.nn.one_hot(targets, K, dtype=jnp.float32)
    smoothed = (1.0 - epsilon) * one_hot + epsilon / K
    return jnp.sum(jnp.mean(-smoothed * log_probs, axis=0))


if __name__ == "__main__":
    key = jax.random.PRNGKey(0)

    # Case 1: small single-tile case (B=8, K=32), f32 logits.
    k1, k2, k3, k4 = jax.random.split(key, 4)
    B, K = 8, 32
    inputs = jax.random.normal(k1, (B, K), dtype=jnp.float32)
    targets = jax.random.randint(k2, (B,), 0, K, dtype=jnp.int32)
    loss = cross_entropy_label_smooth(inputs, targets, epsilon=0.1)
    jax.block_until_ready(loss)
    ref = _reference(inputs, targets, epsilon=0.1)
    assert jnp.allclose(loss, ref, rtol=1e-5, atol=1e-5), (loss, ref)

    # Case 2: non-multiple batch with a forced small tile (exercises the grid,
    # batch padding + masking, and the parallel batch axis).
    B2, K2 = 37, 160
    inputs2 = jax.random.normal(k3, (B2, K2), dtype=jnp.float32) * 3.0
    targets2 = jax.random.randint(k4, (B2,), 0, K2, dtype=jnp.int32)
    loss2 = cross_entropy_label_smooth(inputs2, targets2, epsilon=0.1, tile_b=8)
    jax.block_until_ready(loss2)
    ref2 = _reference(inputs2, targets2, epsilon=0.1)
    assert jnp.allclose(loss2, ref2, rtol=1e-5, atol=1e-5), (loss2, ref2)

    # Case 3: bf16 logits DMA'd in native dtype (no wrapper-side f32 copy).
    inputs3 = inputs2.astype(jnp.bfloat16)
    loss3 = cross_entropy_label_smooth(inputs3, targets2, epsilon=0.1, tile_b=16)
    jax.block_until_ready(loss3)
    ref3 = _reference(inputs3, targets2, epsilon=0.1)
    assert jnp.allclose(loss3, ref3, rtol=1e-4, atol=1e-4), (loss3, ref3)

    print("KERNEL_OK")
</pallas_src>

<mosaic_0001>
module attributes {stable_mosaic.version = 11 : i64} {
  func.func @_ce_label_smooth_kernel(%arg0: i32, %arg1: memref<8x32xf32, #tpu.memory_space<vmem>>, %arg2: memref<8x1xi32, #tpu.memory_space<vmem>>, %arg3: memref<8x1xf32, #tpu.memory_space<vmem>>) attributes {dimension_semantics = [#tpu.dimension_semantics<parallel>], iteration_bounds = array<i64: 1>, scalar_prefetch = 0 : i64, scratch_operands = 0 : i64, tpu.core_type = #tpu.core_type<tc>, window_params = [{transform_indices = @transform_0, window_bounds = array<i64: 8, 32>}, {transform_indices = @transform_1, window_bounds = array<i64: 8, 1>}, {transform_indices = @transform_2, window_bounds = array<i64: 8, 1>}]} {
    %c0 = arith.constant 0 : index
    %c0_0 = arith.constant 0 : index
    %0 = vector.load %arg1[%c0, %c0_0] : memref<8x32xf32, #tpu.memory_space<vmem>>, vector<8x32xf32>
    %c0_1 = arith.constant 0 : index
    %c0_2 = arith.constant 0 : index
    %1 = vector.load %arg2[%c0_1, %c0_2] : memref<8x1xi32, #tpu.memory_space<vmem>>, vector<8x1xi32>
    %cst = arith.constant dense<0xFF800000> : vector<8xf32>
    %2 = vector.multi_reduction <maximumf>, %0, %cst [1] : vector<8x32xf32> to vector<8xf32>
    %3 = vector.shape_cast %2 : vector<8xf32> to vector<8x1xf32>
    %4 = vector.broadcast %3 : vector<8x1xf32> to vector<8x32xf32>
    %5 = arith.subf %0, %4 : vector<8x32xf32>
    %6 = math.exp %5 : vector<8x32xf32>
    %cst_3 = arith.constant dense<0.000000e+00> : vector<8xf32>
    %7 = vector.multi_reduction <add>, %6, %cst_3 [1] : vector<8x32xf32> to vector<8xf32>
    %8 = vector.shape_cast %7 : vector<8xf32> to vector<8x1xf32>
    %9 = math.log %8 : vector<8x1xf32>
    %10 = tpu.iota {dimensions = array<i32: 1>} : vector<8x32xi32>
    %11 = vector.broadcast %1 : vector<8x1xi32> to vector<8x32xi32>
    %12 = arith.cmpi eq, %10, %11 : vector<8x32xi32>
    %cst_4 = arith.constant 0.000000e+00 : f32
    %13 = vector.broadcast %cst_4 : f32 to vector<8x32xf32>
    %14 = arith.select %12, %5, %13 : vector<8x32xi1>, vector<8x32xf32>
    %cst_5 = arith.constant dense<0.000000e+00> : vector<8xf32>
    %15 = vector.multi_reduction <add>, %14, %cst_5 [1] : vector<8x32xf32> to vector<8xf32>
    %16 = vector.shape_cast %15 : vector<8xf32> to vector<8x1xf32>
    %cst_6 = arith.constant dense<0.000000e+00> : vector<8xf32>
    %17 = vector.multi_reduction <add>, %5, %cst_6 [1] : vector<8x32xf32> to vector<8xf32>
    %18 = vector.shape_cast %17 : vector<8xf32> to vector<8x1xf32>
    %19 = arith.subf %9, %16 : vector<8x1xf32>
    %cst_7 = arith.constant 0.899999976 : f32
    %20 = vector.broadcast %cst_7 : f32 to vector<8x1xf32>
    %21 = arith.mulf %20, %19 : vector<8x1xf32>
    %cst_8 = arith.constant 3.200000e+01 : f32
    %22 = vector.broadcast %cst_8 : f32 to vector<8x1xf32>
    %23 = arith.mulf %22, %9 : vector<8x1xf32>
    %24 = arith.subf %23, %18 : vector<8x1xf32>
    %cst_9 = arith.constant 3.125000e-03 : f32
    %25 = vector.broadcast %cst_9 : f32 to vector<8x1xf32>
    %26 = arith.mulf %25, %24 : vector<8x1xf32>
    %27 = arith.addf %21, %26 : vector<8x1xf32>
    %c8_i32 = arith.constant 8 : i32
    %28 = arith.muli %arg0, %c8_i32 : i32
    %29 = tpu.iota {dimensions = array<i32: 0>} : vector<8x1xi32>
    %30 = vector.broadcast %28 : i32 to vector<8x1xi32>
    %31 = arith.addi %30, %29 : vector<8x1xi32>
    %c8_i32_10 = arith.constant 8 : i32
    %32 = vector.broadcast %c8_i32_10 : i32 to vector<8x1xi32>
    %33 = arith.cmpi slt, %31, %32 : vector<8x1xi32>
    %cst_11 = arith.constant 0.000000e+00 : f32
    %34 = vector.broadcast %cst_11 : f32 to vector<8x1xf32>
    %35 = arith.select %33, %27, %34 : vector<8x1xi1>, vector<8x1xf32>
    %c0_12 = arith.constant 0 : index
    %c0_13 = arith.constant 0 : index
    %36 = vector.load %arg3[%c0_12, %c0_13] : memref<8x1xf32, #tpu.memory_space<vmem>>, vector<8x1xf32>
    tpu.vector_store %arg3[%c0_12, %c0_13], %35 {strides = array<i32>} : memref<8x1xf32, #tpu.memory_space<vmem>>, vector<8x1xf32>,
    return
  }
  func.func @transform_0(%arg0: i32) -> (i32, i32) {
    %c0_i32 = arith.constant 0 : i32
    %c0_i32_0 = arith.constant 0 : i32
    return %arg0, %c0_i32 : i32, i32
  }
  func.func @transform_1(%arg0: i32) -> (i32, i32) {
    %c0_i32 = arith.constant 0 : i32
    %c0_i32_0 = arith.constant 0 : i32
    return %arg0, %c0_i32 : i32, i32
  }
  func.func @transform_2(%arg0: i32) -> (i32, i32) {
    %c0_i32 = arith.constant 0 : i32
    %c0_i32_0 = arith.constant 0 : i32
    return %arg0, %c0_i32 : i32, i32
  }
}

</mosaic_0001>

<llo_original>
// kernel: tpu_custom_call.1
$region0: #{tpu_custom_call.1}
  #allocation0 [shape = 'u32[]', space=smem, size = 0x4, offset = 0x4, fixed_abs, tag = 'smem constant byte address 0x4 - core index']
  #allocation1 [shape = 'u32[144,128]{1,0:T(1,128)}', space=vmem, size = 0x12000, scoped, tag = 'internal scratch']
  %s0 = inlined_call_operand.vmem [shape: f32[8,32], index: 0, kind: input, shape index: {}]
  %s1 = inlined_call_operand.vmem [shape: s32[8,1], index: 1, kind: input, shape index: {}]
  %s2 = inlined_call_operand.vmem [shape: f32[8,1], index: 2, kind: output, shape index: {}]
  %s3 = sld [smem:[#allocation0]]
  $region18: #{tpu_custom_call.1} parent=0
    _
  %s5 = ssub.s32 1, %s3
  %s6 = scalar_select 0, %s5, %s3
  // Predicated region
  $region2: #{tpu_custom_call.1} parent=0 // pred_check
    _
  $region3: #{tpu_custom_call.1} parent=0 // pred_check_branch
    %8 = sbr.rel (0) target = $region5
  $region4: #{tpu_custom_call.1} parent=0 // pred_region
    _
  $region5: #{tpu_custom_call.1} parent=0 // pred_fallthru
    _
  // Predicated region
  $region6: #{tpu_custom_call.1} parent=0 // pred_check
    _
  $region7: #{tpu_custom_call.1} parent=0 // pred_check_branch
    %10 = sbr.rel (0) target = $region9
  $region8: #{tpu_custom_call.1} parent=0 // pred_region
    _
  $region9: #{tpu_custom_call.1} parent=0 // pred_fallthru
    _
  %v11 = vld [vmem:[%s0] sm:$0xff]
  %v12 = vld [vmem:[%s1] sm:$0xff]
  %vm13 = vcmask 261120
  %v14 = vsel %vm13, %v11, -inf
  %15 = vmax.xlane.f32.xlu0 %v14
  %v16 = vpop.xlane.xlu0 %15
  %v17 = vsub.f32 %v11, %v16
  %v18 = vmul.f32 %v17, 1.442695
  %v19 = vpow.pop %v18
  %v20 = vsel %vm13, %v19, 0.0
  %21 = vadd.xlane.f32.xlu0 %v20
  %v22 = vpop.xlane.xlu0 %21
  %v23 = vlog2.pop %v22
  %v24 = vmul.f32 %v23, 0.6931472
  %v25 = vlaneseq
  %v26 = vand.u32 %v25, 127
  %27 = vset.pattern.permute.xlu0 0
  %28 = vperm.xlu0 %27, %v12
  %v29 = vpop.permute.xlu0 %28
  %vm30 = vcmp.eq.s32.totalorder %v26, %v29
  %v31 = vsel %vm30, %v17, 0.0
  %v32 = vsel %vm13, %v31, 0.0
  %33 = vadd.xlane.f32.xlu0 %v32
  %v34 = vpop.xlane.xlu0 %33
  %v35 = vsel %vm13, %v17, 0.0
  %36 = vadd.xlane.f32.xlu0 %v35
  %v37 = vpop.xlane.xlu0 %36
  %v38 = vsub.f32 %v24, %v34
  %v39 = vmul.f32 %v38, 0.9
  %v40 = vmul.f32 %v24, 32.0
  %v41 = vsub.f32 %v40, %v37
  %v42 = vmul.f32 %v41, 0.003125
  %v43 = vadd.f32 %v39, %v42
  %s44 = smul.u32 0, 8
  %v45 = vlaneseq
  %v46 = vshrl.u32 %v45, 7
  %v47 = vstv %s44
  %v48 = vadd.s32 %v47, %v46
  %vm49 = vcmp.lt.s32.totalorder %v48, 8
  %v50 = vsel %vm49, %v43, 0.0
  %vm51 = vcmask 7168
  %52 = vst.msk [vmem:[%s2] sm:$0xff] %vm51, %v50
  // Predicated region
  $region10: #{tpu_custom_call.1} parent=0 // pred_check
    _
  $region11: #{tpu_custom_call.1} parent=0 // pred_check_branch
    %54 = sbr.rel (0) target = $region13
  $region12: #{tpu_custom_call.1} parent=0 // pred_region
    _
  $region13: #{tpu_custom_call.1} parent=0 // pred_fallthru
    _
  // Predicated region
  $region14: #{tpu_custom_call.1} parent=0 // pred_check
    _
  $region15: #{tpu_custom_call.1} parent=0 // pred_check_branch
    %56 = sbr.rel (0) target = $region17
  $region16: #{tpu_custom_call.1} parent=0 // pred_region
    _
  $region17: #{tpu_custom_call.1} parent=0 // pred_fallthru
    _

</llo_original>
